<compile_context>
chip_gen: v7x
topology: tpu7x:2x2x1
jax: 0.10.0
libtpu: 0.0.40
codegen_flags: <defaults>
</compile_context>

<pallas_src>
import functools

import jax
import jax.numpy as jnp
from jax.experimental import pallas as pl
from jax.experimental.pallas import tpu as pltpu


def _round_up(x: int, m: int) -> int:
    return ((x + m - 1) // m) * m


def _choose_tile_b(batch: int, d_pad: int) -> int:
    """Largest multiple-of-8 row tile whose 3 double-buffered f32 inputs stay
    well inside the scoped-VMEM budget on v5e / v6e / v7x."""
    bytes_per_row = 3 * 2 * 4 * d_pad          # 3 inputs x 2 buffers x f32
    budget = 12 * 1024 * 1024                  # ~12 MiB for the pipelined inputs
    tb = budget // bytes_per_row
    tb = min(tb, 1024, _round_up(batch, 8))    # bigger tiles: diminishing returns
    tb = max(8, (tb // 8) * 8)
    return tb


def _triplet_loss_kernel(a_ref, p_ref, n_ref, o_ref, acc_ref, *,
                         margin: float, true_b: int, tile_b: int):
    i = pl.program_id(0)

    @pl.when(i == 0)
    def _init():
        acc_ref[...] = jnp.zeros_like(acc_ref)

    a = a_ref[...]
    p = p_ref[...]
    n = n_ref[...]

    dp = a - p
    dn = a - n
    # Fused: one cross-lane reduction instead of two.
    delta = dp * dp - dn * dn                              # (TB, Dp)
    dist = jnp.sum(delta, axis=1, keepdims=True)           # (TB, 1) = pos - neg
    loss = jnp.maximum(dist + jnp.float32(margin), 0.0)    # (TB, 1)

    # Mask batch-padding rows (zero-padded rows would contribute relu(margin) != 0).
    row = i * tile_b + jax.lax.broadcasted_iota(jnp.int32, (tile_b, 1), 0)
    loss = jnp.where(row < true_b, loss, 0.0)

    acc_ref[...] += jnp.sum(loss, axis=0, keepdims=True)   # (1, 1)

    @pl.when(i == pl.num_programs(0) - 1)
    def _finalize():
        o_ref[...] = acc_ref[...] * jnp.float32(1.0 / true_b)


def siamese_triplet_loss(anchor, positive, negative, margin: float = 1.0):
    """Mean triplet margin loss (squared-L2 distances) as a Pallas TPU kernel."""
    assert anchor.shape == positive.shape == negative.shape
    assert anchor.ndim == 2
    B, D = anchor.shape

    anchor = anchor.astype(jnp.float32)
    positive = positive.astype(jnp.float32)
    negative = negative.astype(jnp.float32)

    # Lane-dense feature layout: pad D to a multiple of 128 (exact: zeros add 0
    # to both squared distances).
    d_pad = _round_up(D, 128)
    tile_b = _choose_tile_b(B, d_pad)
    b_pad = _round_up(B, tile_b)

    def _pad(x):
        return jnp.pad(x, ((0, b_pad - B), (0, d_pad - D)))

    a, p, n = _pad(anchor), _pad(positive), _pad(negative)
    num_tiles = b_pad // tile_b

    kernel = functools.partial(
        _triplet_loss_kernel, margin=float(margin), true_b=B, tile_b=tile_b)

    out = pl.pallas_call(
        kernel,
        out_shape=jax.ShapeDtypeStruct((1, 1), jnp.float32),
        grid_spec=pltpu.PrefetchScalarGridSpec(
            num_scalar_prefetch=0,
            grid=(num_tiles,),
            in_specs=[
                pl.BlockSpec((tile_b, d_pad), lambda i: (i, 0)),
                pl.BlockSpec((tile_b, d_pad), lambda i: (i, 0)),
                pl.BlockSpec((tile_b, d_pad), lambda i: (i, 0)),
            ],
            out_specs=pl.BlockSpec((1, 1), lambda i: (0, 0)),
            scratch_shapes=[pltpu.VMEM((1, 1), jnp.float32)],
        ),
        compiler_params=pltpu.CompilerParams(
            dimension_semantics=("arbitrary",),   # carried accumulator axis
            vmem_limit_bytes=32 * 1024 * 1024,
        ),
    )(a, p, n)
    return out[0, 0]


def _reference(anchor, positive, negative, margin: float = 1.0):
    pos_dist = jnp.sum((anchor - positive) ** 2, axis=1)
    neg_dist = jnp.sum((anchor - negative) ** 2, axis=1)
    return jnp.mean(jax.nn.relu(pos_dist - neg_dist + margin))


if __name__ == "__main__":
    key = jax.random.PRNGKey(0)

    # Primary small case, matching (batch, embedding_dim) inputs.
    k1, k2, k3, k4, k5, k6 = jax.random.split(key, 6)
    B, D = 8, 32
    anchor = jax.random.normal(k1, (B, D), dtype=jnp.float32)
    positive = jax.random.normal(k2, (B, D), dtype=jnp.float32)
    negative = jax.random.normal(k3, (B, D), dtype=jnp.float32)

    loss = siamese_triplet_loss(anchor, positive, negative, margin=1.0)
    loss = jax.block_until_ready(loss)
    ref = _reference(anchor, positive, negative, margin=1.0)
    assert jnp.allclose(loss, ref, rtol=1e-5, atol=1e-5), (loss, ref)

    # Ragged / padded case: B not a multiple of 8, D not a multiple of 128.
    B2, D2 = 13, 40
    a2 = jax.random.normal(k4, (B2, D2), dtype=jnp.float32)
    p2 = jax.random.normal(k5, (B2, D2), dtype=jnp.float32)
    n2 = jax.random.normal(k6, (B2, D2), dtype=jnp.float32)
    loss2 = jax.block_until_ready(siamese_triplet_loss(a2, p2, n2, margin=0.5))
    ref2 = _reference(a2, p2, n2, margin=0.5)
    assert jnp.allclose(loss2, ref2, rtol=1e-5, atol=1e-5), (loss2, ref2)

    print("KERNEL_OK")
</pallas_src>

<mosaic_0001>
module attributes {stable_mosaic.version = 11 : i64} {
  func.func @_triplet_loss_kernel(%arg0: i32, %arg1: memref<8x128xf32, #tpu.memory_space<vmem>>, %arg2: memref<8x128xf32, #tpu.memory_space<vmem>>, %arg3: memref<8x128xf32, #tpu.memory_space<vmem>>, %arg4: memref<1x1xf32, #tpu.memory_space<vmem>>, %arg5: memref<1x1xf32, #tpu.memory_space<vmem>>) attributes {dimension_semantics = [#tpu.dimension_semantics<arbitrary>], iteration_bounds = array<i64: 1>, scalar_prefetch = 0 : i64, scratch_operands = 1 : i64, tpu.core_type = #tpu.core_type<tc>, window_params = [{transform_indices = @transform_0, window_bounds = array<i64: 8, 128>}, {transform_indices = @transform_1, window_bounds = array<i64: 8, 128>}, {transform_indices = @transform_2, window_bounds = array<i64: 8, 128>}, {pipeline_mode = #tpu.pipeline_mode<synchronous>, transform_indices = @transform_3, window_bounds = array<i64: 1, 1>}]} {
    %c0_i32 = arith.constant 0 : i32
    %0 = arith.cmpi eq, %arg0, %c0_i32 : i32
    %1 = arith.extui %0 : i1 to i32
    %c0_i32_0 = arith.constant 0 : i32
    %2 = arith.cmpi ne, %1, %c0_i32_0 : i32
    scf.if %2 {
      %cst_17 = arith.constant 0.000000e+00 : f32
      %33 = vector.broadcast %cst_17 : f32 to vector<1x1xf32>
      %c0_18 = arith.constant 0 : index
      %c0_19 = arith.constant 0 : index
      %34 = vector.load %arg5[%c0_18, %c0_19] : memref<1x1xf32, #tpu.memory_space<vmem>>, vector<1x1xf32>
      tpu.vector_store %arg5[%c0_18, %c0_19], %33 {strides = array<i32>} : memref<1x1xf32, #tpu.memory_space<vmem>>, vector<1x1xf32>,
    } else {
    }
    %c0 = arith.constant 0 : index
    %c0_1 = arith.constant 0 : index
    %3 = vector.load %arg1[%c0, %c0_1] : memref<8x128xf32, #tpu.memory_space<vmem>>, vector<8x128xf32>
    %c0_2 = arith.constant 0 : index
    %c0_3 = arith.constant 0 : index
    %4 = vector.load %arg2[%c0_2, %c0_3] : memref<8x128xf32, #tpu.memory_space<vmem>>, vector<8x128xf32>
    %c0_4 = arith.constant 0 : index
    %c0_5 = arith.constant 0 : index
    %5 = vector.load %arg3[%c0_4, %c0_5] : memref<8x128xf32, #tpu.memory_space<vmem>>, vector<8x128xf32>
    %6 = arith.subf %3, %4 : vector<8x128xf32>
    %7 = arith.subf %3, %5 : vector<8x128xf32>
    %8 = arith.mulf %6, %6 : vector<8x128xf32>
    %9 = arith.mulf %7, %7 : vector<8x128xf32>
    %10 = arith.subf %8, %9 : vector<8x128xf32>
    %cst = arith.constant dense<0.000000e+00> : vector<8xf32>
    %11 = vector.multi_reduction <add>, %10, %cst [1] : vector<8x128xf32> to vector<8xf32>
    %12 = vector.shape_cast %11 : vector<8xf32> to vector<8x1xf32>
    %cst_6 = arith.constant 1.000000e+00 : f32
    %13 = vector.broadcast %cst_6 : f32 to vector<8x1xf32>
    %14 = arith.addf %12, %13 : vector<8x1xf32>
    %cst_7 = arith.constant 0.000000e+00 : f32
    %15 = vector.broadcast %cst_7 : f32 to vector<8x1xf32>
    %16 = arith.maximumf %14, %15 : vector<8x1xf32>
    %c8_i32 = arith.constant 8 : i32
    %17 = arith.muli %arg0, %c8_i32 : i32
    %18 = tpu.iota {dimensions = array<i32: 0>} : vector<8x1xi32>
    %19 = vector.broadcast %17 : i32 to vector<8x1xi32>
    %20 = arith.addi %19, %18 : vector<8x1xi32>
    %c8_i32_8 = arith.constant 8 : i32
    %21 = vector.broadcast %c8_i32_8 : i32 to vector<8x1xi32>
    %22 = arith.cmpi slt, %20, %21 : vector<8x1xi32>
    %cst_9 = arith.constant 0.000000e+00 : f32
    %23 = vector.broadcast %cst_9 : f32 to vector<8x1xf32>
    %24 = arith.select %22, %16, %23 : vector<8x1xi1>, vector<8x1xf32>
    %c0_10 = arith.constant 0 : index
    %c0_11 = arith.constant 0 : index
    %25 = vector.load %arg5[%c0_10, %c0_11] : memref<1x1xf32, #tpu.memory_space<vmem>>, vector<1x1xf32>
    %cst_12 = arith.constant dense<0.000000e+00> : vector<1xf32>
    %26 = vector.multi_reduction <add>, %24, %cst_12 [0] : vector<8x1xf32> to vector<1xf32>
    %27 = vector.shape_cast %26 : vector<1xf32> to vector<1x1xf32>
    %28 = arith.addf %25, %27 : vector<1x1xf32>
    %c0_13 = arith.constant 0 : index
    %c0_14 = arith.constant 0 : index
    %29 = vector.load %arg5[%c0_13, %c0_14] : memref<1x1xf32, #tpu.memory_space<vmem>>, vector<1x1xf32>
    tpu.vector_store %arg5[%c0_13, %c0_14], %28 {strides = array<i32>} : memref<1x1xf32, #tpu.memory_space<vmem>>, vector<1x1xf32>,
    %c0_i32_15 = arith.constant 0 : i32
    %30 = arith.cmpi eq, %arg0, %c0_i32_15 : i32
    %31 = arith.extui %30 : i1 to i32
    %c0_i32_16 = arith.constant 0 : i32
    %32 = arith.cmpi ne, %31, %c0_i32_16 : i32
    scf.if %32 {
      %c0_17 = arith.constant 0 : index
      %c0_18 = arith.constant 0 : index
      %33 = vector.load %arg5[%c0_17, %c0_18] : memref<1x1xf32, #tpu.memory_space<vmem>>, vector<1x1xf32>
      %cst_19 = arith.constant 1.250000e-01 : f32
      %34 = vector.broadcast %cst_19 : f32 to vector<1x1xf32>
      %35 = arith.mulf %33, %34 : vector<1x1xf32>
      %c0_20 = arith.constant 0 : index
      %c0_21 = arith.constant 0 : index
      %36 = vector.load %arg4[%c0_20, %c0_21] : memref<1x1xf32, #tpu.memory_space<vmem>>, vector<1x1xf32>
      tpu.vector_store %arg4[%c0_20, %c0_21], %35 {strides = array<i32>} : memref<1x1xf32, #tpu.memory_space<vmem>>, vector<1x1xf32>,
    } else {
    }
    return
  }
  func.func @transform_0(%arg0: i32) -> (i32, i32) {
    %c0_i32 = arith.constant 0 : i32
    %c0_i32_0 = arith.constant 0 : i32
    return %arg0, %c0_i32 : i32, i32
  }
  func.func @transform_1(%arg0: i32) -> (i32, i32) {
    %c0_i32 = arith.constant 0 : i32
    %c0_i32_0 = arith.constant 0 : i32
    return %arg0, %c0_i32 : i32, i32
  }
  func.func @transform_2(%arg0: i32) -> (i32, i32) {
    %c0_i32 = arith.constant 0 : i32
    %c0_i32_0 = arith.constant 0 : i32
    return %arg0, %c0_i32 : i32, i32
  }
  func.func @transform_3(%arg0: i32) -> (i32, i32) {
    %c0_i32 = arith.constant 0 : i32
    %c0_i32_0 = arith.constant 0 : i32
    %c0_i32_1 = arith.constant 0 : i32
    return %c0_i32, %c0_i32_0 : i32, i32
  }
}

</mosaic_0001>

<llo_original>
// kernel: tpu_custom_call.1
$region0: #{tpu_custom_call.1}
  #allocation0 [shape = 'u32[]', space=smem, size = 0x4, offset = 0x4, fixed_abs, tag = 'smem constant byte address 0x4 - core index']
  #allocation1 [shape = 'u32[144,128]{1,0:T(1,128)}', space=vmem, size = 0x12000, scoped, tag = 'internal scratch']
  #allocation2 [shape = 'f32[1,1]{1,0:T(1,128)}', space=vmem, size = 0x200, scoped, tag = 'scratch operand']
  %s0 = inlined_call_operand.hbm [shape: f32[8,128], index: 0, kind: input, shape index: {}]
  %s1 = inlined_call_operand.hbm [shape: f32[8,128], index: 1, kind: input, shape index: {}]
  %s2 = inlined_call_operand.hbm [shape: f32[8,128], index: 2, kind: input, shape index: {}]
  %s3 = inlined_call_operand.hbm [shape: f32[1,1], index: 3, kind: output, shape index: {}]
  %s4 = sld [smem:[#allocation0]]
  $region42: #{tpu_custom_call.1} parent=0
    _
  %s6 = ssub.s32 1, %s4
  %s7 = scalar_select 0, %s6, %s4
  $region1: #{tpu_custom_call.1} parent=0
    #allocation3 [shape = 'u8[4096]{0}', space=vmem, size = 0x1000, scoped, tag = 'input window, operand 0, single buffered']
    #allocation4 [shape = 's32[1]{0}', space=sflag, size = 0x4, scoped, tag = 'scoped memory for tpu_custom_call.1']
    #allocation5 [shape = 's32[1]{0}', space=sflag, size = 0x4, scoped, tag = 'scoped memory for tpu_custom_call.1']
    #allocation6 [shape = 'u8[4096]{0}', space=vmem, size = 0x1000, scoped, tag = 'input window, operand 1, single buffered']
    #allocation7 [shape = 's32[1]{0}', space=sflag, size = 0x4, scoped, tag = 'scoped memory for tpu_custom_call.1']
    #allocation8 [shape = 'u8[4096]{0}', space=vmem, size = 0x1000, scoped, tag = 'input window, operand 2, single buffered']
    #allocation9 [shape = 'u8[512]{0}', space=vmem, size = 0x400, scoped, tag = 'output window, operand 0, single buffered']
    %8 = vsyncpa [#allocation4], 0
    %9 = vsyncpa [#allocation7], 0
    %10 = vsyncpa [#allocation5], 0
    // Predicated region
    $region2: #{tpu_custom_call.1} parent=1 // pred_check
      _
    $region3: #{tpu_custom_call.1} parent=1 // pred_check_branch
      %12 = sbr.rel (0) target = $region5
    $region4: #{tpu_custom_call.1} parent=1 // pred_region
      %s14 = ssub.s32 128, 128
      %15 = vsyncadd [#allocation4], %s14
      %s17 = sshll.u32 [#allocation3], 4
      %s18 = int_to_ptr.vmem [resolvable:$true] %s17
      %20 = dma.hbm_to_vmem [thread:$0]  %s0, 128, %s18, [#allocation4]
    $region5: #{tpu_custom_call.1} parent=1 // pred_fallthru
      _
    // Predicated region
    $region6: #{tpu_custom_call.1} parent=1 // pred_check
      _
    $region7: #{tpu_custom_call.1} parent=1 // pred_check_branch
      %22 = sbr.rel (0) target = $region9
    $region8: #{tpu_custom_call.1} parent=1 // pred_region
      %s24 = ssub.s32 128, 128
      %25 = vsyncadd [#allocation7], %s24
      %s27 = sshll.u32 [#allocation6], 4
      %s28 = int_to_ptr.vmem [resolvable:$true] %s27
      %30 = dma.hbm_to_vmem [thread:$0]  %s1, 128, %s28, [#allocation7]
    $region9: #{tpu_custom_call.1} parent=1 // pred_fallthru
      _
    // Predicated region
    $region10: #{tpu_custom_call.1} parent=1 // pred_check
      _
    $region11: #{tpu_custom_call.1} parent=1 // pred_check_branch
      %32 = sbr.rel (0) target = $region13
    $region12: #{tpu_custom_call.1} parent=1 // pred_region
      %s34 = ssub.s32 128, 128
      %35 = vsyncadd [#allocation7], %s34
      %s37 = sshll.u32 [#allocation8], 4
      %s38 = int_to_ptr.vmem [resolvable:$true] %s37
      %40 = dma.hbm_to_vmem [thread:$0]  %s2, 128, %s38, [#allocation7]
    $region13: #{tpu_custom_call.1} parent=1 // pred_fallthru
      _
    // Predicated region
    $region14: #{tpu_custom_call.1} parent=1 // pred_check
      _
    $region15: #{tpu_custom_call.1} parent=1 // pred_check_branch
      %42 = sbr.rel (0) target = $region17
    $region16: #{tpu_custom_call.1} parent=1 // pred_region
      %43 = dma.done [#allocation4], 128
    $region17: #{tpu_custom_call.1} parent=1 // pred_fallthru
      _
    // Predicated region
    $region18: #{tpu_custom_call.1} parent=1 // pred_check
      _
    $region19: #{tpu_custom_call.1} parent=1 // pred_check_branch
      %45 = sbr.rel (0) target = $region21
    $region20: #{tpu_custom_call.1} parent=1 // pred_region
      %46 = dma.done [#allocation7], 128
    $region21: #{tpu_custom_call.1} parent=1 // pred_fallthru
      _
    // Predicated region
    $region22: #{tpu_custom_call.1} parent=1 // pred_check
      _
    $region23: #{tpu_custom_call.1} parent=1 // pred_check_branch
      %48 = sbr.rel (0) target = $region25
    $region24: #{tpu_custom_call.1} parent=1 // pred_region
      %49 = dma.done [#allocation7], 128
    $region25: #{tpu_custom_call.1} parent=1 // pred_fallthru
      _
    %p50 = scmp.eq.s32.totalorder 0, 0
    // Predicated region
    $region26: #{tpu_custom_call.1} parent=1 // pred_check
      %p51 = pneg %p50
    $region27: #{tpu_custom_call.1} parent=1 // pred_check_branch
      %53 = sbr.rel (%p51) target = $region29
    $region28: #{tpu_custom_call.1} parent=1 // pred_region
      %vm54 = vcmask 0
      %55 = vst.msk [vmem:[#allocation2] sm:$0x1] %vm54, 0.0
    $region29: #{tpu_custom_call.1} parent=1 // pred_fallthru
      _
    %v56 = vld [vmem:[#allocation3] sm:$0xff]
    %v57 = vld [vmem:[#allocation6] sm:$0xff]
    %v58 = vld [vmem:[#allocation8] sm:$0xff]
    %v59 = vsub.f32 %v56, %v57
    %v60 = vsub.f32 %v56, %v58
    %v61 = vmul.f32 %v59, %v59
    %v62 = vmul.f32 %v60, %v60
    %v63 = vsub.f32 %v61, %v62
    %64 = vadd.xlane.f32.xlu0 %v63
    %v65 = vpop.xlane.xlu0 %64
    %v66 = vadd.f32 %v65, 1.0
    %v67 = vmax.f32 %v66, 0.0
    %s68 = smul.u32 0, 8
    %v69 = vlaneseq
    %v70 = vshrl.u32 %v69, 7
    %v71 = vstv %s68
    %v72 = vadd.s32 %v71, %v70
    %vm73 = vcmp.lt.s32.totalorder %v72, 8
    %v74 = vsel %vm73, %v67, 0.0
    %v75 = vld [vmem:[#allocation2] sm:$0x1]
    %v76 = vrot.slane %v74, 4
    %v77 = vadd.f32 %v74, %v76
    %v78 = vrot.slane %v77, 2
    %v79 = vadd.f32 %v77, %v78
    %v80 = vrot.slane %v79, 1
    %v81 = vadd.f32 %v79, %v80
    %v82 = vadd.f32 %v75, %v81
    %vm83 = vcmask 0
    %84 = vst.msk [vmem:[#allocation2] sm:$0x1] %vm83, %v82
    // Predicated region
    $region30: #{tpu_custom_call.1} parent=1 // pred_check
      %p85 = pneg %p50
    $region31: #{tpu_custom_call.1} parent=1 // pred_check_branch
      %87 = sbr.rel (%p85) target = $region33
    $region32: #{tpu_custom_call.1} parent=1 // pred_region
      %v88 = vld [vmem:[#allocation2] sm:$0x1]
      %v89 = vmul.f32 %v88, 0.125
      %90 = vst.msk [vmem:[#allocation9] sm:$0x1] %vm83, %v89
    $region33: #{tpu_custom_call.1} parent=1 // pred_fallthru
      _
    // Predicated region
    $region34: #{tpu_custom_call.1} parent=1 // pred_check
      _
    $region35: #{tpu_custom_call.1} parent=1 // pred_check_branch
      %92 = sbr.rel (0) target = $region37
    $region36: #{tpu_custom_call.1} parent=1 // pred_region
      %s94 = ssub.s32 16, 16
      %95 = vsyncadd [#allocation5], %s94
      %s97 = sshll.u32 [#allocation9], 4
      %s98 = int_to_ptr.vmem [resolvable:$true] %s97
      %100 = dma.vmem_to_hbm [thread:$0]  %s98, 16, %s3, [#allocation5]
    $region37: #{tpu_custom_call.1} parent=1 // pred_fallthru
      _
    // Predicated region
    $region38: #{tpu_custom_call.1} parent=1 // pred_check
      _
    $region39: #{tpu_custom_call.1} parent=1 // pred_check_branch
      %102 = sbr.rel (0) target = $region41
    $region40: #{tpu_custom_call.1} parent=1 // pred_region
      %103 = dma.done [#allocation5], 16
    $region41: #{tpu_custom_call.1} parent=1 // pred_fallthru
      _
    %104 = vsyncpa [#allocation4], 1
    %105 = vsyncpa [#allocation7], 1
    %106 = vsyncpa [#allocation5], 1

</llo_original>
